<compile_context>
chip_gen: v7x
topology: tpu7x:2x2x1
jax: 0.10.0
libtpu: 0.0.40
codegen_flags: <defaults>
</compile_context>

<pallas_src>
import functools
import math

import jax
import jax.numpy as jnp
from jax.experimental import pallas as pl
from jax.experimental.pallas import tpu as pltpu


def _sinusoidal_kernel(x_ref, tab_ref, out_ref, *, fold):
    # x_ref:   (tb, fold)      f32 — `fold` consecutive positions per output row
    # tab_ref: (fold + 1, W)   f32 — rows 0..fold-1: freqs masked to lane
    #                                segment g (zeros elsewhere);
    #                                row fold: phase row (0 | pi/2) tiled.
    # out_ref: (tb, W)         f32 — W = fold * dim (128 when folding).
    x = x_ref[...]
    arg = tab_ref[fold:fold + 1, :]              # phase; broadcasts over rows
    for g in range(fold):                        # exact: other segments add 0.0
        arg = arg + x[:, g:g + 1] * tab_ref[g:g + 1, :]
    # cos(t) == sin(t + pi/2): single sin pass + single unmasked store.
    out_ref[...] = jnp.sin(arg)


def sinusoidal_pos_emb(x, dim, theta=10000, target_block_bytes=4 * 1024 * 1024):
    """Pallas implementation of SinusoidalPosEmb.forward.

    x: (B,) float array of positions / timesteps.
    Returns (B, dim) float32 = concat(sin(x[:,None]*freqs), cos(x[:,None]*freqs), -1).
    """
    assert dim % 2 == 0 and dim >= 4, "dim must be even and >= 4 (half_dim-1 > 0)"
    x = jnp.asarray(x, jnp.float32)
    (B,) = x.shape
    half = dim // 2

    # How many batch rows to fold into the 128-lane axis (lane-dense output).
    if dim < 128 and 128 % dim == 0:
        fold = 128 // dim
        while B % fold:          # power of two, so this terminates at fold == 1
            fold //= 2
    else:
        fold = 1
    W = fold * dim
    rows = B // fold

    # ---- constant tables (built once in the wrapper) -----------------------
    scale = math.log(theta) / (half - 1)
    freqs = jnp.exp(jnp.arange(half, dtype=jnp.float32) * -scale)        # (half,)
    freq_seg = jnp.concatenate([freqs, freqs])                           # (dim,)
    phase_seg = jnp.concatenate(
        [jnp.zeros((half,), jnp.float32),
         jnp.full((half,), math.pi / 2, dtype=jnp.float32)])             # (dim,)
    freq_row = jnp.tile(freq_seg, fold)                                  # (W,)
    phase_row = jnp.tile(phase_seg, fold)                                # (W,)
    seg_id = jnp.repeat(jnp.arange(fold, dtype=jnp.int32), dim)          # (W,)
    seg_rows = jnp.where(
        seg_id[None, :] == jnp.arange(fold, dtype=jnp.int32)[:, None],
        freq_row[None, :], 0.0)                                          # (fold, W)
    table = jnp.concatenate([seg_rows, phase_row[None, :]], axis=0)      # (fold+1, W)

    # ---- byte-budgeted row tile --------------------------------------------
    # ~target_block_bytes of f32 output per grid step; 2x (double-buffered)
    # stays well under every generation's scoped VMEM default.
    budget_rows = max(8, (target_block_bytes // (W * 4)) // 8 * 8)
    tb = min(budget_rows, rows)      # either tb % 8 == 0, or tb == rows (full extent)
    grid = (pl.cdiv(rows, tb),)      # partial last block is clamped by Pallas

    x2 = x.reshape(rows, fold)       # free, row-major contiguous view

    out = pl.pallas_call(
        functools.partial(_sinusoidal_kernel, fold=fold),
        out_shape=jax.ShapeDtypeStruct((rows, W), jnp.float32),
        grid=grid,
        in_specs=[
            # (tb, fold): last dim equals full array extent, tb rule satisfied.
            pl.BlockSpec((tb, fold), lambda i: (i, 0)),
            # Constant table: full extent both dims, same block every step
            # (Pallas skips the re-DMA when the block index is unchanged).
            pl.BlockSpec((fold + 1, W), lambda i: (0, 0)),
        ],
        # (tb, W): lane-dense, full-width output block.
        out_specs=pl.BlockSpec((tb, W), lambda i: (i, 0)),
        compiler_params=pltpu.CompilerParams(
            dimension_semantics=("parallel",)),
    )(x2, table)

    # Free reshape of the lane-folded, contiguous result back to (B, dim).
    return out.reshape(B, dim)


def _reference(x, dim, theta=10000):
    half_dim = dim // 2
    scale = math.log(theta) / (half_dim - 1)
    freqs = jnp.exp(jnp.arange(half_dim, dtype=jnp.float32) * -scale)
    emb = x[:, None].astype(jnp.float32) * freqs[None, :]
    return jnp.concatenate([jnp.sin(emb), jnp.cos(emb)], axis=-1)


if __name__ == "__main__":
    key = jax.random.PRNGKey(0)
    B, dim = 8, 32
    # Positions / diffusion timesteps (float), small deterministic example.
    x = jax.random.uniform(key, (B,), dtype=jnp.float32) * 100.0

    out = jax.block_until_ready(sinusoidal_pos_emb(x, dim))
    ref = _reference(x, dim)

    assert out.shape == (B, dim)
    assert out.dtype == jnp.float32
    # cos(t) is computed as sin(t + pi/2); adding pi/2 in f32 before range
    # reduction shifts the argument by ~ulp(|t|) (~4e-6 at t~100), far below
    # embedding precision requirements.
    max_err = float(jnp.max(jnp.abs(out - ref)))
    assert max_err < 1e-4, max_err
    print("KERNEL_OK")
</pallas_src>

<mosaic_0001>
module attributes {stable_mosaic.version = 11 : i64} {
  func.func @_sinusoidal_kernel(%arg0: i32, %arg1: memref<2x4xf32, #tpu.memory_space<vmem>>, %arg2: memref<5x128xf32, #tpu.memory_space<vmem>>, %arg3: memref<2x128xf32, #tpu.memory_space<vmem>>) attributes {dimension_semantics = [#tpu.dimension_semantics<parallel>], iteration_bounds = array<i64: 1>, scalar_prefetch = 0 : i64, scratch_operands = 0 : i64, tpu.core_type = #tpu.core_type<tc>, window_params = [{transform_indices = @transform_0, window_bounds = array<i64: 2, 4>}, {pipeline_mode = #tpu.pipeline_mode<synchronous>, transform_indices = @transform_1, window_bounds = array<i64: 5, 128>}, {transform_indices = @transform_2, window_bounds = array<i64: 2, 128>}]} {
    %c0 = arith.constant 0 : index
    %c0_0 = arith.constant 0 : index
    %0 = vector.load %arg1[%c0, %c0_0] : memref<2x4xf32, #tpu.memory_space<vmem>>, vector<2x4xf32>
    %c4 = arith.constant 4 : index
    %c0_1 = arith.constant 0 : index
    %1 = vector.load %arg2[%c4, %c0_1] : memref<5x128xf32, #tpu.memory_space<vmem>>, vector<1x128xf32>
    %2 = vector.extract_strided_slice %0 {offsets = [0, 0], sizes = [2, 1], strides = [1, 1]} : vector<2x4xf32> to vector<2x1xf32>
    %c0_2 = arith.constant 0 : index
    %c0_3 = arith.constant 0 : index
    %3 = vector.load %arg2[%c0_2, %c0_3] : memref<5x128xf32, #tpu.memory_space<vmem>>, vector<1x128xf32>
    %4 = vector.broadcast %2 : vector<2x1xf32> to vector<2x128xf32>
    %5 = vector.broadcast %3 : vector<1x128xf32> to vector<2x128xf32>
    %6 = arith.mulf %4, %5 : vector<2x128xf32>
    %7 = vector.broadcast %1 : vector<1x128xf32> to vector<2x128xf32>
    %8 = arith.addf %7, %6 : vector<2x128xf32>
    %9 = vector.extract_strided_slice %0 {offsets = [0, 1], sizes = [2, 1], strides = [1, 1]} : vector<2x4xf32> to vector<2x1xf32>
    %c1 = arith.constant 1 : index
    %c0_4 = arith.constant 0 : index
    %10 = vector.load %arg2[%c1, %c0_4] : memref<5x128xf32, #tpu.memory_space<vmem>>, vector<1x128xf32>
    %11 = vector.broadcast %9 : vector<2x1xf32> to vector<2x128xf32>
    %12 = vector.broadcast %10 : vector<1x128xf32> to vector<2x128xf32>
    %13 = arith.mulf %11, %12 : vector<2x128xf32>
    %14 = arith.addf %8, %13 : vector<2x128xf32>
    %15 = vector.extract_strided_slice %0 {offsets = [0, 2], sizes = [2, 1], strides = [1, 1]} : vector<2x4xf32> to vector<2x1xf32>
    %c2 = arith.constant 2 : index
    %c0_5 = arith.constant 0 : index
    %16 = vector.load %arg2[%c2, %c0_5] : memref<5x128xf32, #tpu.memory_space<vmem>>, vector<1x128xf32>
    %17 = vector.broadcast %15 : vector<2x1xf32> to vector<2x128xf32>
    %18 = vector.broadcast %16 : vector<1x128xf32> to vector<2x128xf32>
    %19 = arith.mulf %17, %18 : vector<2x128xf32>
    %20 = arith.addf %14, %19 : vector<2x128xf32>
    %21 = vector.extract_strided_slice %0 {offsets = [0, 3], sizes = [2, 1], strides = [1, 1]} : vector<2x4xf32> to vector<2x1xf32>
    %c3 = arith.constant 3 : index
    %c0_6 = arith.constant 0 : index
    %22 = vector.load %arg2[%c3, %c0_6] : memref<5x128xf32, #tpu.memory_space<vmem>>, vector<1x128xf32>
    %23 = vector.broadcast %21 : vector<2x1xf32> to vector<2x128xf32>
    %24 = vector.broadcast %22 : vector<1x128xf32> to vector<2x128xf32>
    %25 = arith.mulf %23, %24 : vector<2x128xf32>
    %26 = arith.addf %20, %25 : vector<2x128xf32>
    %27 = math.sin %26 : vector<2x128xf32>
    %c0_7 = arith.constant 0 : index
    %c0_8 = arith.constant 0 : index
    %28 = vector.load %arg3[%c0_7, %c0_8] : memref<2x128xf32, #tpu.memory_space<vmem>>, vector<2x128xf32>
    tpu.vector_store %arg3[%c0_7, %c0_8], %27 {strides = array<i32>} : memref<2x128xf32, #tpu.memory_space<vmem>>, vector<2x128xf32>,
    return
  }
  func.func @transform_0(%arg0: i32) -> (i32, i32) {
    %c0_i32 = arith.constant 0 : i32
    %c0_i32_0 = arith.constant 0 : i32
    return %arg0, %c0_i32 : i32, i32
  }
  func.func @transform_1(%arg0: i32) -> (i32, i32) {
    %c0_i32 = arith.constant 0 : i32
    %c0_i32_0 = arith.constant 0 : i32
    %c0_i32_1 = arith.constant 0 : i32
    return %c0_i32, %c0_i32_0 : i32, i32
  }
  func.func @transform_2(%arg0: i32) -> (i32, i32) {
    %c0_i32 = arith.constant 0 : i32
    %c0_i32_0 = arith.constant 0 : i32
    return %arg0, %c0_i32 : i32, i32
  }
}

</mosaic_0001>

<llo_original>
// kernel: tpu_custom_call.1
$region0: #{tpu_custom_call.1}
  #allocation0 [shape = 'u32[]', space=smem, size = 0x4, offset = 0x4, fixed_abs, tag = 'smem constant byte address 0x4 - core index']
  #allocation1 [shape = 'u32[144,128]{1,0:T(1,128)}', space=vmem, size = 0x12000, scoped, tag = 'internal scratch']
  %s0 = inlined_call_operand.hbm [shape: f32[2,4], index: 0, kind: input, shape index: {}]
  %s1 = inlined_call_operand.hbm [shape: f32[5,128], index: 1, kind: input, shape index: {}]
  %s2 = inlined_call_operand.hbm [shape: f32[2,128], index: 2, kind: output, shape index: {}]
  %s3 = sld [smem:[#allocation0]]
  $region26: #{tpu_custom_call.1} parent=0
    _
  %s5 = ssub.s32 1, %s3
  %s6 = scalar_select 0, %s5, %s3
  $region1: #{tpu_custom_call.1} parent=0
    #allocation2 [shape = 'u8[1024]{0}', space=vmem, size = 0x400, scoped, tag = 'input window, operand 0, single buffered']
    #allocation3 [shape = 's32[1]{0}', space=sflag, size = 0x4, scoped, tag = 'scoped memory for tpu_custom_call.1']
    #allocation4 [shape = 's32[1]{0}', space=sflag, size = 0x4, scoped, tag = 'scoped memory for tpu_custom_call.1']
    #allocation5 [shape = 'u8[4096]{0}', space=vmem, size = 0x1000, scoped, tag = 'input window, operand 1, single buffered']
    #allocation6 [shape = 's32[1]{0}', space=sflag, size = 0x4, scoped, tag = 'scoped memory for tpu_custom_call.1']
    #allocation7 [shape = 'u8[1024]{0}', space=vmem, size = 0x400, scoped, tag = 'output window, operand 0, single buffered']
    %7 = vsyncpa [#allocation3], 0
    %8 = vsyncpa [#allocation6], 0
    %9 = vsyncpa [#allocation4], 0
    // Predicated region
    $region2: #{tpu_custom_call.1} parent=1 // pred_check
      _
    $region3: #{tpu_custom_call.1} parent=1 // pred_check_branch
      %11 = sbr.rel (0) target = $region5
    $region4: #{tpu_custom_call.1} parent=1 // pred_region
      %s13 = ssub.s32 32, 32
      %14 = vsyncadd [#allocation3], %s13
      %s16 = sshll.u32 [#allocation2], 4
      %s17 = int_to_ptr.vmem [resolvable:$true] %s16
      %19 = dma.hbm_to_vmem [thread:$0]  %s0, 32, %s17, [#allocation3]
    $region5: #{tpu_custom_call.1} parent=1 // pred_fallthru
      _
    // Predicated region
    $region6: #{tpu_custom_call.1} parent=1 // pred_check
      _
    $region7: #{tpu_custom_call.1} parent=1 // pred_check_branch
      %21 = sbr.rel (0) target = $region9
    $region8: #{tpu_custom_call.1} parent=1 // pred_region
      %s23 = ssub.s32 128, 128
      %24 = vsyncadd [#allocation6], %s23
      %s26 = sshll.u32 [#allocation5], 4
      %s27 = int_to_ptr.vmem [resolvable:$true] %s26
      %29 = dma.hbm_to_vmem [thread:$0]  %s1, 128, %s27, [#allocation6]
    $region9: #{tpu_custom_call.1} parent=1 // pred_fallthru
      _
    // Predicated region
    $region10: #{tpu_custom_call.1} parent=1 // pred_check
      _
    $region11: #{tpu_custom_call.1} parent=1 // pred_check_branch
      %31 = sbr.rel (0) target = $region13
    $region12: #{tpu_custom_call.1} parent=1 // pred_region
      %32 = dma.done [#allocation3], 32
    $region13: #{tpu_custom_call.1} parent=1 // pred_fallthru
      _
    // Predicated region
    $region14: #{tpu_custom_call.1} parent=1 // pred_check
      _
    $region15: #{tpu_custom_call.1} parent=1 // pred_check_branch
      %34 = sbr.rel (0) target = $region17
    $region16: #{tpu_custom_call.1} parent=1 // pred_region
      %35 = dma.done [#allocation6], 128
    $region17: #{tpu_custom_call.1} parent=1 // pred_fallthru
      _
    %v36 = vld [vmem:[#allocation2] sm:$0x3]
    %v37 = vld [vmem:[#allocation5 + $0x4] sm:$0x1]
    %v38 = vld [vmem:[#allocation5] sm:$0x1]
    %40 = vset.pattern.permute.xlu0 0
    %41 = vperm.xlu0 %40, %v36
    %v42 = vpop.permute.xlu0 %41
    %v44 = vlaneseq
    %v45 = vshrl.u32 %v44, 7
    %v46 = vsub.s32 0, %v45
    %v47 = vrot.slane %v38, %v46
    %v48 = vmul.f32 %v42, %v47
    %v49 = vlaneseq
    %v50 = vshrl.u32 %v49, 7
    %v51 = vsub.s32 0, %v50
    %v52 = vrot.slane %v37, %v51
    %v53 = vadd.f32 %v52, %v48
    %v54 = vld [vmem:[#allocation5 + $0x1] sm:$0x1]
    %55 = vset.pattern.permute.xlu0 1
    %56 = vperm.xlu0 %55, %v36
    %v57 = vpop.permute.xlu0 %56
    %v59 = vlaneseq
    %v60 = vshrl.u32 %v59, 7
    %v61 = vsub.s32 0, %v60
    %v62 = vrot.slane %v54, %v61
    %v63 = vmul.f32 %v57, %v62
    %v64 = vadd.f32 %v53, %v63
    %v65 = vld [vmem:[#allocation5 + $0x2] sm:$0x1]
    %66 = vset.pattern.permute.xlu0 2
    %67 = vperm.xlu0 %66, %v36
    %v68 = vpop.permute.xlu0 %67
    %v70 = vlaneseq
    %v71 = vshrl.u32 %v70, 7
    %v72 = vsub.s32 0, %v71
    %v73 = vrot.slane %v65, %v72
    %v74 = vmul.f32 %v68, %v73
    %v75 = vadd.f32 %v64, %v74
    %v76 = vld [vmem:[#allocation5 + $0x3] sm:$0x1]
    %77 = vset.pattern.permute.xlu0 3
    %78 = vperm.xlu0 %77, %v36
    %v79 = vpop.permute.xlu0 %78
    %v81 = vlaneseq
    %v82 = vshrl.u32 %v81, 7
    %v83 = vsub.s32 0, %v82
    %v84 = vrot.slane %v76, %v83
    %v85 = vmul.f32 %v79, %v84
    %v86 = vadd.f32 %v75, %v85
    %v87 = vand.u32 2147483647, %v86
    %vm88 = vcmp.le.f32.partialorder %v87, 0.7853982
    %vm89 = vcmp.lt.s32.totalorder %v86, 0
    %v90 = vand.u32 %v86, 2139095040
    %v91 = vshrl.u32 %v90, 23
    %v92 = vsub.s32 %v91, 127
    %v93 = vand.u32 2147483647, %v86
    %v94 = vand.u32 %v93, 8388607
    %v95 = vor.u32 %v94, 8388608
    %v96 = vsub.s32 0, %v95
    %v97 = vadd.s32 %v92, 1
    %vm98 = vcmp.gt.s32.totalorder %v97, 0
    %v99 = vsel %vm98, %v97, 0
    %v100 = vshrl.u32 %v99, 5
    %v101 = vand.u32 %v99, 31
    %v102 = vsub.s32 32, %v101
    %v103 = vshrl.u32 683565275, %v102
    %v104 = vshll.u32 683565275, %v101
    %v105 = vshrl.u32 2475754826, %v102
    %v106 = vor.u32 %v104, %v105
    %v107 = vshll.u32 2475754826, %v101
    %v108 = vshrl.u32 2131351028, %v102
    %v109 = vor.u32 %v107, %v108
    %v110 = vshll.u32 2131351028, %v101
    %v111 = vshrl.u32 2102212464, %v102
    %v112 = vor.u32 %v110, %v111
    %v113 = vshll.u32 2102212464, %v101
    %v114 = vshrl.u32 920167782, %v102
    %v115 = vor.u32 %v113, %v114
    %v116 = vshll.u32 920167782, %v101
    %v117 = vshrl.u32 1326507024, %v102
    %v118 = vor.u32 %v116, %v117
    %vm119 = vcmp.lt.s32.totalorder %v100, 1
    %vm120 = vcmp.lt.s32.totalorder %v100, 2
    %vm121 = vcmp.lt.s32.totalorder %v100, 3
    %vm122 = vcmp.lt.s32.totalorder %v100, 4
    %v123 = vsel %vm119, %v103, %v106
    %v124 = vsel %vm122, %v112, 2102212464
    %v125 = vsel %vm121, %v109, %v124
    %v126 = vsel %vm120, %v123, %v125
    %v127 = vsel %vm119, %v106, %v109
    %v128 = vsel %vm122, %v115, 920167782
    %v129 = vsel %vm121, %v112, %v128
    %v130 = vsel %vm120, %v127, %v129
    %v131 = vsel %vm119, %v109, %v112
    %v132 = vsel %vm122, %v118, 1326507024
    %v133 = vsel %vm121, %v115, %v132
    %v134 = vsel %vm120, %v131, %v133
    %v135 = vshll.u32 %v95, 8
    %v136 = vmul.u32.u64.compose %v135, %v134
    %v137 = vextract.low.u32 %v136
    %v138 = vextract.high.u32 %v136
    %v139 = vmul.u32.u64.compose %v135, %v130
    %v140 = vextract.low.u32 %v139
    %v141 = vextract.high.u32 %v139
    %v142 = vmul.u32 %v135, %v126
    %v143 = vadd.s32 %v138, %v140
    %vm144 = vc.u32 %v138, %v140
    %v145 = vadd.s32 %v141, 1
    %v146 = vsel %vm144, %v145, %v141
    %v147 = vadd.s32 %v142, %v146
    %v148 = vadd.s32 %v147, 536870912
    %v149 = vshrl.u32 %v148, 30
    %v150 = vshll.u32 %v149, 30
    %v151 = vsub.s32 %v147, %v150
    %vm152 = vcmp.lt.s32.totalorder %v151, 0
    %v153 = vsub.s32 0, %v151
    %v154 = vsel %vm152, %v153, %v151
    %v155 = vclz %v154
    %v156 = vsub.s32 %v155, 2
    %vm157 = vcmp.gt.s32.totalorder 0, %v156
    %v158 = vsel %vm157, 0, %v156
    %v159 = vsub.s32 32, %v158
    %v160 = vshll.u32 %v151, %v158
    %v161 = vshrl.u32 %v143, %v159
    %v162 = vor.u32 %v160, %v161
    %v163 = vsub.s32 4294967266, %v158
    %v164 = vadd.s32 %v163, 127
    %v165 = vshll.u32 %v164, 23
    %v166 = vor.u32 4788187, %v165
    %v167 = vand.u32 2147483647, %v166
    %v169 = vcvt.s32.f32 %v162
    %v170 = vmul.f32 %v169, %v167
    %v171 = vxor.u32 %v170, 2147483648
    %v172 = vsel %vm89, %v171, %v170
    %v173 = vsub.s32 4, %v149
    %v174 = vsel %vm89, %v173, %v149
    %v175 = vsel %vm88, %v86, %v172
    %v176 = vsel %vm88, 0, %v174
    %v177 = vcosq.f32.pop %v175
    %v178 = vsinq.f32.pop %v175
    %vm179 = vweird.f32 %v86
    %v180 = vadd.s32 %v176, 3
    %v181 = vand.u32 %v180, 3
    %vm182 = vcmp.lt.s32.totalorder %v181, 2
    %vm183 = vcmp.eq.s32.totalorder %v181, 0
    %v184 = vxor.u32 %v178, 2147483648
    %v185 = vsel %vm183, %v177, %v184
    %vm186 = vcmp.eq.s32.totalorder %v181, 2
    %v187 = vxor.u32 %v177, 2147483648
    %v188 = vsel %vm186, %v187, %v178
    %v189 = vsel %vm182, %v185, %v188
    %v190 = vsel %vm179, nan, %v189
    %191 = vst [vmem:[#allocation7] sm:$0x3] %v190
    // Predicated region
    $region18: #{tpu_custom_call.1} parent=1 // pred_check
      _
    $region19: #{tpu_custom_call.1} parent=1 // pred_check_branch
      %193 = sbr.rel (0) target = $region21
    $region20: #{tpu_custom_call.1} parent=1 // pred_region
      %s195 = ssub.s32 32, 32
      %196 = vsyncadd [#allocation4], %s195
      %s198 = sshll.u32 [#allocation7], 4
      %s199 = int_to_ptr.vmem [resolvable:$true] %s198
      %201 = dma.vmem_to_hbm [thread:$0]  %s199, 32, %s2, [#allocation4]
    $region21: #{tpu_custom_call.1} parent=1 // pred_fallthru
      _
    // Predicated region
    $region22: #{tpu_custom_call.1} parent=1 // pred_check
      _
    $region23: #{tpu_custom_call.1} parent=1 // pred_check_branch
      %203 = sbr.rel (0) target = $region25
    $region24: #{tpu_custom_call.1} parent=1 // pred_region
      %204 = dma.done [#allocation4], 32
    $region25: #{tpu_custom_call.1} parent=1 // pred_fallthru
      _
    %205 = vsyncpa [#allocation3], 1
    %206 = vsyncpa [#allocation6], 1
    %207 = vsyncpa [#allocation4], 1

</llo_original>
